<compile_context>
chip_gen: v7x
topology: tpu7x:2x2x1
jax: 0.10.0
libtpu: 0.0.40
codegen_flags: <defaults>
</compile_context>

<pallas_src>
import functools

import jax
import jax.numpy as jnp
import numpy as np
from jax.experimental import pallas as pl
from jax.experimental.pallas import tpu as pltpu


def _tree_sum(terms):
    """Pairwise (log-depth) sum of a list of arrays."""
    while len(terms) > 1:
        nxt = [terms[i] + terms[i + 1] for i in range(0, len(terms) - 1, 2)]
        if len(terms) % 2:
            nxt.append(terms[-1])
        terms = nxt
    return terms[0]


def _block_cls2d_kernel(x_ref, wc_ref, wft_ref, b_ref, o_ref, *, cin, ncls, hw):
    """Fused BlockCls2d forward for a block of Bn images.

    x_ref  : VMEM (Bn, cin*hw)  images; pixels lane-dense, images on sublanes
    wc_ref : SMEM (ncls, cin)   1x1 conv weight (no bias) -> scalar reads
    wft_ref: VMEM (ncls, ncls)  fc weight, pre-transposed (out = p @ wft + b)
    b_ref  : VMEM (1, ncls)     fc bias row
    o_ref  : VMEM (Bn, ncls)    logits
    """
    inv_hw = jnp.float32(1.0 / hw)

    # --- 1x1 conv + ReLU + global average pool, one output channel at a time ---
    # y_k[n, p] = relu(sum_c wc[k, c] * x[n, c, p]);  pooled_k[n] = mean_p y_k[n, p]
    pooled = []
    for k in range(ncls):
        terms = [
            wc_ref[k, c] * x_ref[:, c * hw:(c + 1) * hw].astype(jnp.float32)
            for c in range(cin)
        ]
        y = jnp.maximum(_tree_sum(terms), 0.0)                      # (Bn, HW)
        pooled.append(jnp.sum(y, axis=1, keepdims=True) * inv_hw)   # (Bn, 1)

    # --- FC on the pooled values (tiny; outer-product accumulation on the VPU) ---
    wft = wft_ref[...].astype(jnp.float32)                           # (K, K) = w_fc.T
    fc_terms = [pooled[k] * wft[k:k + 1, :] for k in range(ncls)]    # (Bn,1)*(1,K)
    out = _tree_sum(fc_terms) + b_ref[...].astype(jnp.float32)       # (Bn, K)

    o_ref[...] = out.astype(o_ref.dtype)


def block_cls2d_forward(x_nchw, w_conv, w_fc, b_fc, *, target_block_bytes=4 << 20):
    """BlockCls2d.forward.

    x_nchw: (N, C, H, W)
    w_conv: (K, C, 1, 1)  -- nn.Conv2d(C, K, 1, bias=False).weight
    w_fc:   (K, K)        -- nn.Linear(K, K).weight
    b_fc:   (K,)          -- nn.Linear(K, K).bias
    returns (N, K)
    """
    N, C, H, W = x_nchw.shape
    K = int(w_conv.shape[0])
    HW = H * W
    CHW = C * HW

    # Boundary glue (free / metadata-only): contiguous reshape puts pixels on the
    # lane axis; squeeze the 1x1 spatial dims; pre-transpose the fc weight.
    x2 = x_nchw.reshape(N, CHW)            # (N, C*HW)
    wc = w_conv[:, :, 0, 0]                # (K, C)   -> SMEM
    wft = w_fc.T                           # (K, K)   out = p @ w_fc.T
    b_row = b_fc.reshape(1, K)             # (1, K)

    # --- choose the per-step image-batch block Bn ---
    # Target ~4 MiB input blocks: double-buffered that is 8 MiB, safe on v7x's
    # 64 MiB VMEM and comfortably under the 32 MiB limit we request; v5e/v6e
    # could go bigger but this already amortizes the per-step overhead.
    bytes_per_image = CHW * x2.dtype.itemsize
    bn_cap = max(8, (target_block_bytes // bytes_per_image) // 8 * 8)
    if N <= bn_cap:
        bn = N                             # single step; full-dim block (exempt from (8,128))
        n_pad = N
    else:
        bn = int(bn_cap)                   # multiple of 8, >=2 grid steps (feeds both v7x TCs)
        n_pad = ((N + bn - 1) // bn) * bn
        if n_pad != N:
            x2 = jnp.pad(x2, ((0, n_pad - N), (0, 0)))
    grid = (n_pad // bn,)

    kernel = functools.partial(_block_cls2d_kernel, cin=C, ncls=K, hw=HW)
    out = pl.pallas_call(
        kernel,
        out_shape=jax.ShapeDtypeStruct((n_pad, K), x_nchw.dtype),
        grid=grid,
        in_specs=[
            pl.BlockSpec((bn, CHW), lambda i: (i, 0)),               # batched image slab
            pl.BlockSpec(memory_space=pltpu.MemorySpace.SMEM),       # conv weights (scalars)
            pl.BlockSpec((K, K), lambda i: (0, 0)),                  # fc weight (full block)
            pl.BlockSpec((1, K), lambda i: (0, 0)),                  # fc bias (full block)
        ],
        out_specs=pl.BlockSpec((bn, K), lambda i: (i, 0)),           # lane-dense (Bn, K) store
        compiler_params=pltpu.CompilerParams(
            dimension_semantics=("parallel",),
            vmem_limit_bytes=32 * 1024 * 1024,
        ),
    )(x2, wc, wft, b_row)
    return out[:N]


def _reference(x_nchw, w_conv, w_fc, b_fc):
    # Pure-JAX reference matching the PyTorch module.
    y = jnp.einsum("nchw,kc->nkhw", x_nchw, w_conv[:, :, 0, 0])   # 1x1 conv, no bias
    y = jnp.maximum(y, 0.0)                                       # ReLU
    p = jnp.mean(y, axis=(2, 3))                                  # AdaptiveAvgPool2d((1,1)) + flatten
    return p @ w_fc.T + b_fc                                      # Linear


if __name__ == "__main__":
    key = jax.random.PRNGKey(0)
    k1, k2, k3, k4, k5 = jax.random.split(key, 5)

    # BlockCls2d(in_channels=4, num_classes=8)
    N, C, H, W = 2, 4, 16, 16
    K = 8

    x = jax.random.normal(k1, (N, C, H, W), jnp.float32)
    w_conv = jax.random.normal(k2, (K, C, 1, 1), jnp.float32) * 0.1
    w_fc = jax.random.normal(k3, (K, K), jnp.float32) * 0.1
    b_fc = jax.random.normal(k4, (K,), jnp.float32) * 0.1

    # Toy case: whole batch in one grid step.
    out = block_cls2d_forward(x, w_conv, w_fc, b_fc)
    jax.block_until_ready(out)
    ref = _reference(x, w_conv, w_fc, b_fc)
    np.testing.assert_allclose(np.asarray(out), np.asarray(ref), rtol=1e-4, atol=1e-4)
    assert out.shape == (N, K)

    # Exercise the batched multi-step grid + ragged-N padding path at small size
    # (force tiny blocks so N=30 -> Bn=8, 4 grid steps).
    N2 = 30
    x_big = jax.random.normal(k5, (N2, C, H, W), jnp.float32)
    out_big = block_cls2d_forward(x_big, w_conv, w_fc, b_fc,
                                  target_block_bytes=32 * 1024)
    jax.block_until_ready(out_big)
    ref_big = _reference(x_big, w_conv, w_fc, b_fc)
    np.testing.assert_allclose(np.asarray(out_big), np.asarray(ref_big),
                               rtol=1e-4, atol=1e-4)
    assert out_big.shape == (N2, K)

    print("KERNEL_OK")
</pallas_src>

<mosaic_0001>
module attributes {stable_mosaic.version = 11 : i64} {
  func.func @_block_cls2d_kernel(%arg0: i32, %arg1: memref<2x1024xf32, #tpu.memory_space<vmem>>, %arg2: memref<8x4xf32, #tpu.memory_space<smem>>, %arg3: memref<8x8xf32, #tpu.memory_space<vmem>>, %arg4: memref<1x8xf32, #tpu.memory_space<vmem>>, %arg5: memref<2x8xf32, #tpu.memory_space<vmem>>) attributes {dimension_semantics = [#tpu.dimension_semantics<parallel>], iteration_bounds = array<i64: 1>, scalar_prefetch = 0 : i64, scratch_operands = 0 : i64, tpu.core_type = #tpu.core_type<tc>, window_params = [{transform_indices = @transform_0, window_bounds = array<i64: 2, 1024>}, {transform_indices = @transform_1, window_bounds = array<i64: 8, 4>}, {pipeline_mode = #tpu.pipeline_mode<synchronous>, transform_indices = @transform_2, window_bounds = array<i64: 8, 8>}, {pipeline_mode = #tpu.pipeline_mode<synchronous>, transform_indices = @transform_3, window_bounds = array<i64: 1, 8>}, {transform_indices = @transform_4, window_bounds = array<i64: 2, 8>}]} {
    %c0 = arith.constant 0 : index
    %c0_0 = arith.constant 0 : index
    %0 = memref.load %arg2[%c0, %c0_0] : memref<8x4xf32, #tpu.memory_space<smem>>
    %c0_1 = arith.constant 0 : index
    %c0_2 = arith.constant 0 : index
    %1 = vector.load %arg1[%c0_1, %c0_2] : memref<2x1024xf32, #tpu.memory_space<vmem>>, vector<2x256xf32>
    %2 = vector.broadcast %0 : f32 to vector<2x256xf32>
    %3 = arith.mulf %2, %1 : vector<2x256xf32>
    %c0_3 = arith.constant 0 : index
    %c1 = arith.constant 1 : index
    %4 = memref.load %arg2[%c0_3, %c1] : memref<8x4xf32, #tpu.memory_space<smem>>
    %c0_4 = arith.constant 0 : index
    %c256 = arith.constant 256 : index
    %5 = vector.load %arg1[%c0_4, %c256] : memref<2x1024xf32, #tpu.memory_space<vmem>>, vector<2x256xf32>
    %6 = vector.broadcast %4 : f32 to vector<2x256xf32>
    %7 = arith.mulf %6, %5 : vector<2x256xf32>
    %c0_5 = arith.constant 0 : index
    %c2 = arith.constant 2 : index
    %8 = memref.load %arg2[%c0_5, %c2] : memref<8x4xf32, #tpu.memory_space<smem>>
    %c0_6 = arith.constant 0 : index
    %c512 = arith.constant 512 : index
    %9 = vector.load %arg1[%c0_6, %c512] : memref<2x1024xf32, #tpu.memory_space<vmem>>, vector<2x256xf32>
    %10 = vector.broadcast %8 : f32 to vector<2x256xf32>
    %11 = arith.mulf %10, %9 : vector<2x256xf32>
    %c0_7 = arith.constant 0 : index
    %c3 = arith.constant 3 : index
    %12 = memref.load %arg2[%c0_7, %c3] : memref<8x4xf32, #tpu.memory_space<smem>>
    %c0_8 = arith.constant 0 : index
    %c768 = arith.constant 768 : index
    %13 = vector.load %arg1[%c0_8, %c768] : memref<2x1024xf32, #tpu.memory_space<vmem>>, vector<2x256xf32>
    %14 = vector.broadcast %12 : f32 to vector<2x256xf32>
    %15 = arith.mulf %14, %13 : vector<2x256xf32>
    %16 = arith.addf %3, %7 : vector<2x256xf32>
    %17 = arith.addf %11, %15 : vector<2x256xf32>
    %18 = arith.addf %16, %17 : vector<2x256xf32>
    %cst = arith.constant 0.000000e+00 : f32
    %19 = vector.broadcast %cst : f32 to vector<2x256xf32>
    %20 = arith.maximumf %18, %19 : vector<2x256xf32>
    %cst_9 = arith.constant dense<0.000000e+00> : vector<2xf32>
    %21 = vector.multi_reduction <add>, %20, %cst_9 [1] : vector<2x256xf32> to vector<2xf32>
    %22 = vector.shape_cast %21 : vector<2xf32> to vector<2x1xf32>
    %cst_10 = arith.constant 3.906250e-03 : f32
    %23 = vector.broadcast %cst_10 : f32 to vector<2x1xf32>
    %24 = arith.mulf %22, %23 : vector<2x1xf32>
    %c1_11 = arith.constant 1 : index
    %c0_12 = arith.constant 0 : index
    %25 = memref.load %arg2[%c1_11, %c0_12] : memref<8x4xf32, #tpu.memory_space<smem>>
    %c0_13 = arith.constant 0 : index
    %c0_14 = arith.constant 0 : index
    %26 = vector.load %arg1[%c0_13, %c0_14] : memref<2x1024xf32, #tpu.memory_space<vmem>>, vector<2x256xf32>
    %27 = vector.broadcast %25 : f32 to vector<2x256xf32>
    %28 = arith.mulf %27, %26 : vector<2x256xf32>
    %c1_15 = arith.constant 1 : index
    %c1_16 = arith.constant 1 : index
    %29 = memref.load %arg2[%c1_15, %c1_16] : memref<8x4xf32, #tpu.memory_space<smem>>
    %c0_17 = arith.constant 0 : index
    %c256_18 = arith.constant 256 : index
    %30 = vector.load %arg1[%c0_17, %c256_18] : memref<2x1024xf32, #tpu.memory_space<vmem>>, vector<2x256xf32>
    %31 = vector.broadcast %29 : f32 to vector<2x256xf32>
    %32 = arith.mulf %31, %30 : vector<2x256xf32>
    %c1_19 = arith.constant 1 : index
    %c2_20 = arith.constant 2 : index
    %33 = memref.load %arg2[%c1_19, %c2_20] : memref<8x4xf32, #tpu.memory_space<smem>>
    %c0_21 = arith.constant 0 : index
    %c512_22 = arith.constant 512 : index
    %34 = vector.load %arg1[%c0_21, %c512_22] : memref<2x1024xf32, #tpu.memory_space<vmem>>, vector<2x256xf32>
    %35 = vector.broadcast %33 : f32 to vector<2x256xf32>
    %36 = arith.mulf %35, %34 : vector<2x256xf32>
    %c1_23 = arith.constant 1 : index
    %c3_24 = arith.constant 3 : index
    %37 = memref.load %arg2[%c1_23, %c3_24] : memref<8x4xf32, #tpu.memory_space<smem>>
    %c0_25 = arith.constant 0 : index
    %c768_26 = arith.constant 768 : index
    %38 = vector.load %arg1[%c0_25, %c768_26] : memref<2x1024xf32, #tpu.memory_space<vmem>>, vector<2x256xf32>
    %39 = vector.broadcast %37 : f32 to vector<2x256xf32>
    %40 = arith.mulf %39, %38 : vector<2x256xf32>
    %41 = arith.addf %28, %32 : vector<2x256xf32>
    %42 = arith.addf %36, %40 : vector<2x256xf32>
    %43 = arith.addf %41, %42 : vector<2x256xf32>
    %cst_27 = arith.constant 0.000000e+00 : f32
    %44 = vector.broadcast %cst_27 : f32 to vector<2x256xf32>
    %45 = arith.maximumf %43, %44 : vector<2x256xf32>
    %cst_28 = arith.constant dense<0.000000e+00> : vector<2xf32>
    %46 = vector.multi_reduction <add>, %45, %cst_28 [1] : vector<2x256xf32> to vector<2xf32>
    %47 = vector.shape_cast %46 : vector<2xf32> to vector<2x1xf32>
    %cst_29 = arith.constant 3.906250e-03 : f32
    %48 = vector.broadcast %cst_29 : f32 to vector<2x1xf32>
    %49 = arith.mulf %47, %48 : vector<2x1xf32>
    %c2_30 = arith.constant 2 : index
    %c0_31 = arith.constant 0 : index
    %50 = memref.load %arg2[%c2_30, %c0_31] : memref<8x4xf32, #tpu.memory_space<smem>>
    %c0_32 = arith.constant 0 : index
    %c0_33 = arith.constant 0 : index
    %51 = vector.load %arg1[%c0_32, %c0_33] : memref<2x1024xf32, #tpu.memory_space<vmem>>, vector<2x256xf32>
    %52 = vector.broadcast %50 : f32 to vector<2x256xf32>
    %53 = arith.mulf %52, %51 : vector<2x256xf32>
    %c2_34 = arith.constant 2 : index
    %c1_35 = arith.constant 1 : index
    %54 = memref.load %arg2[%c2_34, %c1_35] : memref<8x4xf32, #tpu.memory_space<smem>>
    %c0_36 = arith.constant 0 : index
    %c256_37 = arith.constant 256 : index
    %55 = vector.load %arg1[%c0_36, %c256_37] : memref<2x1024xf32, #tpu.memory_space<vmem>>, vector<2x256xf32>
    %56 = vector.broadcast %54 : f32 to vector<2x256xf32>
    %57 = arith.mulf %56, %55 : vector<2x256xf32>
    %c2_38 = arith.constant 2 : index
    %c2_39 = arith.constant 2 : index
    %58 = memref.load %arg2[%c2_38, %c2_39] : memref<8x4xf32, #tpu.memory_space<smem>>
    %c0_40 = arith.constant 0 : index
    %c512_41 = arith.constant 512 : index
    %59 = vector.load %arg1[%c0_40, %c512_41] : memref<2x1024xf32, #tpu.memory_space<vmem>>, vector<2x256xf32>
    %60 = vector.broadcast %58 : f32 to vector<2x256xf32>
    %61 = arith.mulf %60, %59 : vector<2x256xf32>
    %c2_42 = arith.constant 2 : index
    %c3_43 = arith.constant 3 : index
    %62 = memref.load %arg2[%c2_42, %c3_43] : memref<8x4xf32, #tpu.memory_space<smem>>
    %c0_44 = arith.constant 0 : index
    %c768_45 = arith.constant 768 : index
    %63 = vector.load %arg1[%c0_44, %c768_45] : memref<2x1024xf32, #tpu.memory_space<vmem>>, vector<2x256xf32>
    %64 = vector.broadcast %62 : f32 to vector<2x256xf32>
    %65 = arith.mulf %64, %63 : vector<2x256xf32>
    %66 = arith.addf %53, %57 : vector<2x256xf32>
    %67 = arith.addf %61, %65 : vector<2x256xf32>
    %68 = arith.addf %66, %67 : vector<2x256xf32>
    %cst_46 = arith.constant 0.000000e+00 : f32
    %69 = vector.broadcast %cst_46 : f32 to vector<2x256xf32>
    %70 = arith.maximumf %68, %69 : vector<2x256xf32>
    %cst_47 = arith.constant dense<0.000000e+00> : vector<2xf32>
    %71 = vector.multi_reduction <add>, %70, %cst_47 [1] : vector<2x256xf32> to vector<2xf32>
    %72 = vector.shape_cast %71 : vector<2xf32> to vector<2x1xf32>
    %cst_48 = arith.constant 3.906250e-03 : f32
    %73 = vector.broadcast %cst_48 : f32 to vector<2x1xf32>
    %74 = arith.mulf %72, %73 : vector<2x1xf32>
    %c3_49 = arith.constant 3 : index
    %c0_50 = arith.constant 0 : index
    %75 = memref.load %arg2[%c3_49, %c0_50] : memref<8x4xf32, #tpu.memory_space<smem>>
    %c0_51 = arith.constant 0 : index
    %c0_52 = arith.constant 0 : index
    %76 = vector.load %arg1[%c0_51, %c0_52] : memref<2x1024xf32, #tpu.memory_space<vmem>>, vector<2x256xf32>
    %77 = vector.broadcast %75 : f32 to vector<2x256xf32>
    %78 = arith.mulf %77, %76 : vector<2x256xf32>
    %c3_53 = arith.constant 3 : index
    %c1_54 = arith.constant 1 : index
    %79 = memref.load %arg2[%c3_53, %c1_54] : memref<8x4xf32, #tpu.memory_space<smem>>
    %c0_55 = arith.constant 0 : index
    %c256_56 = arith.constant 256 : index
    %80 = vector.load %arg1[%c0_55, %c256_56] : memref<2x1024xf32, #tpu.memory_space<vmem>>, vector<2x256xf32>
    %81 = vector.broadcast %79 : f32 to vector<2x256xf32>
    %82 = arith.mulf %81, %80 : vector<2x256xf32>
    %c3_57 = arith.constant 3 : index
    %c2_58 = arith.constant 2 : index
    %83 = memref.load %arg2[%c3_57, %c2_58] : memref<8x4xf32, #tpu.memory_space<smem>>
    %c0_59 = arith.constant 0 : index
    %c512_60 = arith.constant 512 : index
    %84 = vector.load %arg1[%c0_59, %c512_60] : memref<2x1024xf32, #tpu.memory_space<vmem>>, vector<2x256xf32>
    %85 = vector.broadcast %83 : f32 to vector<2x256xf32>
    %86 = arith.mulf %85, %84 : vector<2x256xf32>
    %c3_61 = arith.constant 3 : index
    %c3_62 = arith.constant 3 : index
    %87 = memref.load %arg2[%c3_61, %c3_62] : memref<8x4xf32, #tpu.memory_space<smem>>
    %c0_63 = arith.constant 0 : index
    %c768_64 = arith.constant 768 : index
    %88 = vector.load %arg1[%c0_63, %c768_64] : memref<2x1024xf32, #tpu.memory_space<vmem>>, vector<2x256xf32>
    %89 = vector.broadcast %87 : f32 to vector<2x256xf32>
    %90 = arith.mulf %89, %88 : vector<2x256xf32>
    %91 = arith.addf %78, %82 : vector<2x256xf32>
    %92 = arith.addf %86, %90 : vector<2x256xf32>
    %93 = arith.addf %91, %92 : vector<2x256xf32>
    %cst_65 = arith.constant 0.000000e+00 : f32
    %94 = vector.broadcast %cst_65 : f32 to vector<2x256xf32>
    %95 = arith.maximumf %93, %94 : vector<2x256xf32>
    %cst_66 = arith.constant dense<0.000000e+00> : vector<2xf32>
    %96 = vector.multi_reduction <add>, %95, %cst_66 [1] : vector<2x256xf32> to vector<2xf32>
    %97 = vector.shape_cast %96 : vector<2xf32> to vector<2x1xf32>
    %cst_67 = arith.constant 3.906250e-03 : f32
    %98 = vector.broadcast %cst_67 : f32 to vector<2x1xf32>
    %99 = arith.mulf %97, %98 : vector<2x1xf32>
    %c4 = arith.constant 4 : index
    %c0_68 = arith.constant 0 : index
    %100 = memref.load %arg2[%c4, %c0_68] : memref<8x4xf32, #tpu.memory_space<smem>>
    %c0_69 = arith.constant 0 : index
    %c0_70 = arith.constant 0 : index
    %101 = vector.load %arg1[%c0_69, %c0_70] : memref<2x1024xf32, #tpu.memory_space<vmem>>, vector<2x256xf32>
    %102 = vector.broadcast %100 : f32 to vector<2x256xf32>
    %103 = arith.mulf %102, %101 : vector<2x256xf32>
    %c4_71 = arith.constant 4 : index
    %c1_72 = arith.constant 1 : index
    %104 = memref.load %arg2[%c4_71, %c1_72] : memref<8x4xf32, #tpu.memory_space<smem>>
    %c0_73 = arith.constant 0 : index
    %c256_74 = arith.constant 256 : index
    %105 = vector.load %arg1[%c0_73, %c256_74] : memref<2x1024xf32, #tpu.memory_space<vmem>>, vector<2x256xf32>
    %106 = vector.broadcast %104 : f32 to vector<2x256xf32>
    %107 = arith.mulf %106, %105 : vector<2x256xf32>
    %c4_75 = arith.constant 4 : index
    %c2_76 = arith.constant 2 : index
    %108 = memref.load %arg2[%c4_75, %c2_76] : memref<8x4xf32, #tpu.memory_space<smem>>
    %c0_77 = arith.constant 0 : index
    %c512_78 = arith.constant 512 : index
    %109 = vector.load %arg1[%c0_77, %c512_78] : memref<2x1024xf32, #tpu.memory_space<vmem>>, vector<2x256xf32>
    %110 = vector.broadcast %108 : f32 to vector<2x256xf32>
    %111 = arith.mulf %110, %109 : vector<2x256xf32>
    %c4_79 = arith.constant 4 : index
    %c3_80 = arith.constant 3 : index
    %112 = memref.load %arg2[%c4_79, %c3_80] : memref<8x4xf32, #tpu.memory_space<smem>>
    %c0_81 = arith.constant 0 : index
    %c768_82 = arith.constant 768 : index
    %113 = vector.load %arg1[%c0_81, %c768_82] : memref<2x1024xf32, #tpu.memory_space<vmem>>, vector<2x256xf32>
    %114 = vector.broadcast %112 : f32 to vector<2x256xf32>
    %115 = arith.mulf %114, %113 : vector<2x256xf32>
    %116 = arith.addf %103, %107 : vector<2x256xf32>
    %117 = arith.addf %111, %115 : vector<2x256xf32>
    %118 = arith.addf %116, %117 : vector<2x256xf32>
    %cst_83 = arith.constant 0.000000e+00 : f32
    %119 = vector.broadcast %cst_83 : f32 to vector<2x256xf32>
    %120 = arith.maximumf %118, %119 : vector<2x256xf32>
    %cst_84 = arith.constant dense<0.000000e+00> : vector<2xf32>
    %121 = vector.multi_reduction <add>, %120, %cst_84 [1] : vector<2x256xf32> to vector<2xf32>
    %122 = vector.shape_cast %121 : vector<2xf32> to vector<2x1xf32>
    %cst_85 = arith.constant 3.906250e-03 : f32
    %123 = vector.broadcast %cst_85 : f32 to vector<2x1xf32>
    %124 = arith.mulf %122, %123 : vector<2x1xf32>
    %c5 = arith.constant 5 : index
    %c0_86 = arith.constant 0 : index
    %125 = memref.load %arg2[%c5, %c0_86] : memref<8x4xf32, #tpu.memory_space<smem>>
    %c0_87 = arith.constant 0 : index
    %c0_88 = arith.constant 0 : index
    %126 = vector.load %arg1[%c0_87, %c0_88] : memref<2x1024xf32, #tpu.memory_space<vmem>>, vector<2x256xf32>
    %127 = vector.broadcast %125 : f32 to vector<2x256xf32>
    %128 = arith.mulf %127, %126 : vector<2x256xf32>
    %c5_89 = arith.constant 5 : index
    %c1_90 = arith.constant 1 : index
    %129 = memref.load %arg2[%c5_89, %c1_90] : memref<8x4xf32, #tpu.memory_space<smem>>
    %c0_91 = arith.constant 0 : index
    %c256_92 = arith.constant 256 : index
    %130 = vector.load %arg1[%c0_91, %c256_92] : memref<2x1024xf32, #tpu.memory_space<vmem>>, vector<2x256xf32>
    %131 = vector.broadcast %129 : f32 to vector<2x256xf32>
    %132 = arith.mulf %131, %130 : vector<2x256xf32>
    %c5_93 = arith.constant 5 : index
    %c2_94 = arith.constant 2 : index
    %133 = memref.load %arg2[%c5_93, %c2_94] : memref<8x4xf32, #tpu.memory_space<smem>>
    %c0_95 = arith.constant 0 : index
    %c512_96 = arith.constant 512 : index
    %134 = vector.load %arg1[%c0_95, %c512_96] : memref<2x1024xf32, #tpu.memory_space<vmem>>, vector<2x256xf32>
    %135 = vector.broadcast %133 : f32 to vector<2x256xf32>
    %136 = arith.mulf %135, %134 : vector<2x256xf32>
    %c5_97 = arith.constant 5 : index
    %c3_98 = arith.constant 3 : index
    %137 = memref.load %arg2[%c5_97, %c3_98] : memref<8x4xf32, #tpu.memory_space<smem>>
    %c0_99 = arith.constant 0 : index
    %c768_100 = arith.constant 768 : index
    %138 = vector.load %arg1[%c0_99, %c768_100] : memref<2x1024xf32, #tpu.memory_space<vmem>>, vector<2x256xf32>
    %139 = vector.broadcast %137 : f32 to vector<2x256xf32>
    %140 = arith.mulf %139, %138 : vector<2x256xf32>
    %141 = arith.addf %128, %132 : vector<2x256xf32>
    %142 = arith.addf %136, %140 : vector<2x256xf32>
    %143 = arith.addf %141, %142 : vector<2x256xf32>
    %cst_101 = arith.constant 0.000000e+00 : f32
    %144 = vector.broadcast %cst_101 : f32 to vector<2x256xf32>
    %145 = arith.maximumf %143, %144 : vector<2x256xf32>
    %cst_102 = arith.constant dense<0.000000e+00> : vector<2xf32>
    %146 = vector.multi_reduction <add>, %145, %cst_102 [1] : vector<2x256xf32> to vector<2xf32>
    %147 = vector.shape_cast %146 : vector<2xf32> to vector<2x1xf32>
    %cst_103 = arith.constant 3.906250e-03 : f32
    %148 = vector.broadcast %cst_103 : f32 to vector<2x1xf32>
    %149 = arith.mulf %147, %148 : vector<2x1xf32>
    %c6 = arith.constant 6 : index
    %c0_104 = arith.constant 0 : index
    %150 = memref.load %arg2[%c6, %c0_104] : memref<8x4xf32, #tpu.memory_space<smem>>
    %c0_105 = arith.constant 0 : index
    %c0_106 = arith.constant 0 : index
    %151 = vector.load %arg1[%c0_105, %c0_106] : memref<2x1024xf32, #tpu.memory_space<vmem>>, vector<2x256xf32>
    %152 = vector.broadcast %150 : f32 to vector<2x256xf32>
    %153 = arith.mulf %152, %151 : vector<2x256xf32>
    %c6_107 = arith.constant 6 : index
    %c1_108 = arith.constant 1 : index
    %154 = memref.load %arg2[%c6_107, %c1_108] : memref<8x4xf32, #tpu.memory_space<smem>>
    %c0_109 = arith.constant 0 : index
    %c256_110 = arith.constant 256 : index
    %155 = vector.load %arg1[%c0_109, %c256_110] : memref<2x1024xf32, #tpu.memory_space<vmem>>, vector<2x256xf32>
    %156 = vector.broadcast %154 : f32 to vector<2x256xf32>
    %157 = arith.mulf %156, %155 : vector<2x256xf32>
    %c6_111 = arith.constant 6 : index
    %c2_112 = arith.constant 2 : index
    %158 = memref.load %arg2[%c6_111, %c2_112] : memref<8x4xf32, #tpu.memory_space<smem>>
    %c0_113 = arith.constant 0 : index
    %c512_114 = arith.constant 512 : index
    %159 = vector.load %arg1[%c0_113, %c512_114] : memref<2x1024xf32, #tpu.memory_space<vmem>>, vector<2x256xf32>
    %160 = vector.broadcast %158 : f32 to vector<2x256xf32>
    %161 = arith.mulf %160, %159 : vector<2x256xf32>
    %c6_115 = arith.constant 6 : index
    %c3_116 = arith.constant 3 : index
    %162 = memref.load %arg2[%c6_115, %c3_116] : memref<8x4xf32, #tpu.memory_space<smem>>
    %c0_117 = arith.constant 0 : index
    %c768_118 = arith.constant 768 : index
    %163 = vector.load %arg1[%c0_117, %c768_118] : memref<2x1024xf32, #tpu.memory_space<vmem>>, vector<2x256xf32>
    %164 = vector.broadcast %162 : f32 to vector<2x256xf32>
    %165 = arith.mulf %164, %163 : vector<2x256xf32>
    %166 = arith.addf %153, %157 : vector<2x256xf32>
    %167 = arith.addf %161, %165 : vector<2x256xf32>
    %168 = arith.addf %166, %167 : vector<2x256xf32>
    %cst_119 = arith.constant 0.000000e+00 : f32
    %169 = vector.broadcast %cst_119 : f32 to vector<2x256xf32>
    %170 = arith.maximumf %168, %169 : vector<2x256xf32>
    %cst_120 = arith.constant dense<0.000000e+00> : vector<2xf32>
    %171 = vector.multi_reduction <add>, %170, %cst_120 [1] : vector<2x256xf32> to vector<2xf32>
    %172 = vector.shape_cast %171 : vector<2xf32> to vector<2x1xf32>
    %cst_121 = arith.constant 3.906250e-03 : f32
    %173 = vector.broadcast %cst_121 : f32 to vector<2x1xf32>
    %174 = arith.mulf %172, %173 : vector<2x1xf32>
    %c7 = arith.constant 7 : index
    %c0_122 = arith.constant 0 : index
    %175 = memref.load %arg2[%c7, %c0_122] : memref<8x4xf32, #tpu.memory_space<smem>>
    %c0_123 = arith.constant 0 : index
    %c0_124 = arith.constant 0 : index
    %176 = vector.load %arg1[%c0_123, %c0_124] : memref<2x1024xf32, #tpu.memory_space<vmem>>, vector<2x256xf32>
    %177 = vector.broadcast %175 : f32 to vector<2x256xf32>
    %178 = arith.mulf %177, %176 : vector<2x256xf32>
    %c7_125 = arith.constant 7 : index
    %c1_126 = arith.constant 1 : index
    %179 = memref.load %arg2[%c7_125, %c1_126] : memref<8x4xf32, #tpu.memory_space<smem>>
    %c0_127 = arith.constant 0 : index
    %c256_128 = arith.constant 256 : index
    %180 = vector.load %arg1[%c0_127, %c256_128] : memref<2x1024xf32, #tpu.memory_space<vmem>>, vector<2x256xf32>
    %181 = vector.broadcast %179 : f32 to vector<2x256xf32>
    %182 = arith.mulf %181, %180 : vector<2x256xf32>
    %c7_129 = arith.constant 7 : index
    %c2_130 = arith.constant 2 : index
    %183 = memref.load %arg2[%c7_129, %c2_130] : memref<8x4xf32, #tpu.memory_space<smem>>
    %c0_131 = arith.constant 0 : index
    %c512_132 = arith.constant 512 : index
    %184 = vector.load %arg1[%c0_131, %c512_132] : memref<2x1024xf32, #tpu.memory_space<vmem>>, vector<2x256xf32>
    %185 = vector.broadcast %183 : f32 to vector<2x256xf32>
    %186 = arith.mulf %185, %184 : vector<2x256xf32>
    %c7_133 = arith.constant 7 : index
    %c3_134 = arith.constant 3 : index
    %187 = memref.load %arg2[%c7_133, %c3_134] : memref<8x4xf32, #tpu.memory_space<smem>>
    %c0_135 = arith.constant 0 : index
    %c768_136 = arith.constant 768 : index
    %188 = vector.load %arg1[%c0_135, %c768_136] : memref<2x1024xf32, #tpu.memory_space<vmem>>, vector<2x256xf32>
    %189 = vector.broadcast %187 : f32 to vector<2x256xf32>
    %190 = arith.mulf %189, %188 : vector<2x256xf32>
    %191 = arith.addf %178, %182 : vector<2x256xf32>
    %192 = arith.addf %186, %190 : vector<2x256xf32>
    %193 = arith.addf %191, %192 : vector<2x256xf32>
    %cst_137 = arith.constant 0.000000e+00 : f32
    %194 = vector.broadcast %cst_137 : f32 to vector<2x256xf32>
    %195 = arith.maximumf %193, %194 : vector<2x256xf32>
    %cst_138 = arith.constant dense<0.000000e+00> : vector<2xf32>
    %196 = vector.multi_reduction <add>, %195, %cst_138 [1] : vector<2x256xf32> to vector<2xf32>
    %197 = vector.shape_cast %196 : vector<2xf32> to vector<2x1xf32>
    %cst_139 = arith.constant 3.906250e-03 : f32
    %198 = vector.broadcast %cst_139 : f32 to vector<2x1xf32>
    %199 = arith.mulf %197, %198 : vector<2x1xf32>
    %c0_140 = arith.constant 0 : index
    %c0_141 = arith.constant 0 : index
    %200 = vector.load %arg3[%c0_140, %c0_141] : memref<8x8xf32, #tpu.memory_space<vmem>>, vector<8x8xf32>
    %201 = vector.extract_strided_slice %200 {offsets = [0, 0], sizes = [1, 8], strides = [1, 1]} : vector<8x8xf32> to vector<1x8xf32>
    %202 = vector.broadcast %24 : vector<2x1xf32> to vector<2x8xf32>
    %203 = vector.broadcast %201 : vector<1x8xf32> to vector<2x8xf32>
    %204 = arith.mulf %202, %203 : vector<2x8xf32>
    %205 = vector.extract_strided_slice %200 {offsets = [1, 0], sizes = [1, 8], strides = [1, 1]} : vector<8x8xf32> to vector<1x8xf32>
    %206 = vector.broadcast %49 : vector<2x1xf32> to vector<2x8xf32>
    %207 = vector.broadcast %205 : vector<1x8xf32> to vector<2x8xf32>
    %208 = arith.mulf %206, %207 : vector<2x8xf32>
    %209 = vector.extract_strided_slice %200 {offsets = [2, 0], sizes = [1, 8], strides = [1, 1]} : vector<8x8xf32> to vector<1x8xf32>
    %210 = vector.broadcast %74 : vector<2x1xf32> to vector<2x8xf32>
    %211 = vector.broadcast %209 : vector<1x8xf32> to vector<2x8xf32>
    %212 = arith.mulf %210, %211 : vector<2x8xf32>
    %213 = vector.extract_strided_slice %200 {offsets = [3, 0], sizes = [1, 8], strides = [1, 1]} : vector<8x8xf32> to vector<1x8xf32>
    %214 = vector.broadcast %99 : vector<2x1xf32> to vector<2x8xf32>
    %215 = vector.broadcast %213 : vector<1x8xf32> to vector<2x8xf32>
    %216 = arith.mulf %214, %215 : vector<2x8xf32>
    %217 = vector.extract_strided_slice %200 {offsets = [4, 0], sizes = [1, 8], strides = [1, 1]} : vector<8x8xf32> to vector<1x8xf32>
    %218 = vector.broadcast %124 : vector<2x1xf32> to vector<2x8xf32>
    %219 = vector.broadcast %217 : vector<1x8xf32> to vector<2x8xf32>
    %220 = arith.mulf %218, %219 : vector<2x8xf32>
    %221 = vector.extract_strided_slice %200 {offsets = [5, 0], sizes = [1, 8], strides = [1, 1]} : vector<8x8xf32> to vector<1x8xf32>
    %222 = vector.broadcast %149 : vector<2x1xf32> to vector<2x8xf32>
    %223 = vector.broadcast %221 : vector<1x8xf32> to vector<2x8xf32>
    %224 = arith.mulf %222, %223 : vector<2x8xf32>
    %225 = vector.extract_strided_slice %200 {offsets = [6, 0], sizes = [1, 8], strides = [1, 1]} : vector<8x8xf32> to vector<1x8xf32>
    %226 = vector.broadcast %174 : vector<2x1xf32> to vector<2x8xf32>
    %227 = vector.broadcast %225 : vector<1x8xf32> to vector<2x8xf32>
    %228 = arith.mulf %226, %227 : vector<2x8xf32>
    %229 = vector.extract_strided_slice %200 {offsets = [7, 0], sizes = [1, 8], strides = [1, 1]} : vector<8x8xf32> to vector<1x8xf32>
    %230 = vector.broadcast %199 : vector<2x1xf32> to vector<2x8xf32>
    %231 = vector.broadcast %229 : vector<1x8xf32> to vector<2x8xf32>
    %232 = arith.mulf %230, %231 : vector<2x8xf32>
    %233 = arith.addf %204, %208 : vector<2x8xf32>
    %234 = arith.addf %212, %216 : vector<2x8xf32>
    %235 = arith.addf %220, %224 : vector<2x8xf32>
    %236 = arith.addf %228, %232 : vector<2x8xf32>
    %237 = arith.addf %233, %234 : vector<2x8xf32>
    %238 = arith.addf %235, %236 : vector<2x8xf32>
    %239 = arith.addf %237, %238 : vector<2x8xf32>
    %c0_142 = arith.constant 0 : index
    %c0_143 = arith.constant 0 : index
    %240 = vector.load %arg4[%c0_142, %c0_143] : memref<1x8xf32, #tpu.memory_space<vmem>>, vector<1x8xf32>
    %241 = vector.broadcast %240 : vector<1x8xf32> to vector<2x8xf32>
    %242 = arith.addf %239, %241 : vector<2x8xf32>
    %c0_144 = arith.constant 0 : index
    %c0_145 = arith.constant 0 : index
    %243 = vector.load %arg5[%c0_144, %c0_145] : memref<2x8xf32, #tpu.memory_space<vmem>>, vector<2x8xf32>
    tpu.vector_store %arg5[%c0_144, %c0_145], %242 {strides = array<i32>} : memref<2x8xf32, #tpu.memory_space<vmem>>, vector<2x8xf32>,
    return
  }
  func.func @transform_0(%arg0: i32) -> (i32, i32) {
    %c0_i32 = arith.constant 0 : i32
    %c0_i32_0 = arith.constant 0 : i32
    return %arg0, %c0_i32 : i32, i32
  }
  func.func @transform_1(%arg0: i32) -> (i32, i32) {
    %c0_i32 = arith.constant 0 : i32
    %c0_i32_0 = arith.constant 0 : i32
    %c0_i32_1 = arith.constant 0 : i32
    return %c0_i32, %c0_i32_0 : i32, i32
  }
  func.func @transform_2(%arg0: i32) -> (i32, i32) {
    %c0_i32 = arith.constant 0 : i32
    %c0_i32_0 = arith.constant 0 : i32
    %c0_i32_1 = arith.constant 0 : i32
    return %c0_i32, %c0_i32_0 : i32, i32
  }
  func.func @transform_3(%arg0: i32) -> (i32, i32) {
    %c0_i32 = arith.constant 0 : i32
    %c0_i32_0 = arith.constant 0 : i32
    %c0_i32_1 = arith.constant 0 : i32
    return %c0_i32, %c0_i32_0 : i32, i32
  }
  func.func @transform_4(%arg0: i32) -> (i32, i32) {
    %c0_i32 = arith.constant 0 : i32
    %c0_i32_0 = arith.constant 0 : i32
    return %arg0, %c0_i32 : i32, i32
  }
}

</mosaic_0001>

<llo_original>
// kernel: tpu_custom_call.1
$region0: #{tpu_custom_call.1}
  #allocation0 [shape = 'u32[]', space=smem, size = 0x4, offset = 0x4, fixed_abs, tag = 'smem constant byte address 0x4 - core index']
  #allocation1 [shape = 'u32[144,128]{1,0:T(1,128)}', space=vmem, size = 0x12000, scoped, tag = 'internal scratch']
  %s0 = inlined_call_operand.hbm [shape: f32[2,1024], index: 0, kind: input, shape index: {}]
  %s1 = inlined_call_operand.vmem [shape: f32[8,4], index: 1, kind: input, shape index: {}]
  %s2 = inlined_call_operand.vmem [shape: f32[8,8], index: 2, kind: input, shape index: {}]
  %s3 = inlined_call_operand.vmem [shape: f32[1,8], index: 3, kind: input, shape index: {}]
  %s4 = inlined_call_operand.hbm [shape: f32[2,8], index: 4, kind: output, shape index: {}]
  %s5 = sld [smem:[#allocation0]]
  $region34: #{tpu_custom_call.1} parent=0
    _
  %s7 = ssub.s32 1, %s5
  %s8 = scalar_select 0, %s7, %s5
  $region1: #{tpu_custom_call.1} parent=0
    #allocation2 [shape = 'u8[8192]{0}', space=vmem, size = 0x2000, scoped, tag = 'input window, operand 0, single buffered']
    #allocation3 [shape = 's32[1]{0}', space=sflag, size = 0x4, scoped, tag = 'scoped memory for tpu_custom_call.1']
    #allocation4 [shape = 's32[1]{0}', space=sflag, size = 0x4, scoped, tag = 'scoped memory for tpu_custom_call.1']
    #allocation5 [shape = 's32[1]{0}', space=sflag, size = 0x4, scoped, tag = 'scoped memory for tpu_custom_call.1']
    #allocation6 [shape = 'u8[4096]{0}', space=smem, size = 0x1000, scoped, tag = 'input window, operand 1, single buffered']
    #allocation7 [shape = 'u8[1024]{0}', space=vmem, size = 0x400, scoped, tag = 'output window, operand 0, single buffered']
    %9 = vsyncpa [#allocation3], 0
    %10 = vsyncpa [#allocation5], 0
    %11 = vsyncpa [#allocation4], 0
    // Predicated region
    $region2: #{tpu_custom_call.1} parent=1 // pred_check
      _
    $region3: #{tpu_custom_call.1} parent=1 // pred_check_branch
      %13 = sbr.rel (0) target = $region5
    $region4: #{tpu_custom_call.1} parent=1 // pred_region
      %s15 = ssub.s32 256, 256
      %16 = vsyncadd [#allocation3], %s15
      %s18 = sshll.u32 [#allocation2], 4
      %s19 = int_to_ptr.vmem [resolvable:$true] %s18
      %21 = dma.hbm_to_vmem [thread:$0]  %s0, 256, %s19, [#allocation3]
    $region5: #{tpu_custom_call.1} parent=1 // pred_fallthru
      _
    // Predicated region
    $region6: #{tpu_custom_call.1} parent=1 // pred_check
      _
    $region7: #{tpu_custom_call.1} parent=1 // pred_check_branch
      %23 = sbr.rel (0) target = $region9
    $region8: #{tpu_custom_call.1} parent=1 // pred_region
      %s25 = ssub.s32 128, 128
      %26 = vsyncadd [#allocation5], %s25
      %s28 = sshll.u32 %s1, 4
      %s29 = int_to_ptr.vmem [resolvable:$true] %s28
      %31 = dma.vmem_to_smem %s29, 128, [#allocation6], [#allocation5]
    $region9: #{tpu_custom_call.1} parent=1 // pred_fallthru
      _
    // Predicated region
    $region10: #{tpu_custom_call.1} parent=1 // pred_check
      _
    $region11: #{tpu_custom_call.1} parent=1 // pred_check_branch
      %33 = sbr.rel (0) target = $region13
    $region12: #{tpu_custom_call.1} parent=1 // pred_region
      _
    $region13: #{tpu_custom_call.1} parent=1 // pred_fallthru
      _
    // Predicated region
    $region14: #{tpu_custom_call.1} parent=1 // pred_check
      _
    $region15: #{tpu_custom_call.1} parent=1 // pred_check_branch
      %35 = sbr.rel (0) target = $region17
    $region16: #{tpu_custom_call.1} parent=1 // pred_region
      _
    $region17: #{tpu_custom_call.1} parent=1 // pred_fallthru
      _
    // Predicated region
    $region18: #{tpu_custom_call.1} parent=1 // pred_check
      _
    $region19: #{tpu_custom_call.1} parent=1 // pred_check_branch
      %37 = sbr.rel (0) target = $region21
    $region20: #{tpu_custom_call.1} parent=1 // pred_region
      %38 = dma.done [#allocation3], 256
    $region21: #{tpu_custom_call.1} parent=1 // pred_fallthru
      _
    // Predicated region
    $region22: #{tpu_custom_call.1} parent=1 // pred_check
      _
    $region23: #{tpu_custom_call.1} parent=1 // pred_check_branch
      %40 = sbr.rel (0) target = $region25
    $region24: #{tpu_custom_call.1} parent=1 // pred_region
      %41 = dma.done [#allocation5], 128
    $region25: #{tpu_custom_call.1} parent=1 // pred_fallthru
      _
    %42 = sfence
    %s43 = sld [smem:[#allocation6]]
    %v44 = vld [vmem:[#allocation2] sm:$0xf]
    %v45 = vstv %s43
    %v46 = vmul.f32 %v45, %v44
    %s47 = sld [smem:[#allocation6 + $0x1]]
    %v48 = vld [vmem:[#allocation2 + $0x4] sm:$0xf]
    %v49 = vstv %s47
    %v50 = vmul.f32 %v49, %v48
    %s51 = sld [smem:[#allocation6 + $0x2]]
    %v52 = vld [vmem:[#allocation2 + $0x8] sm:$0xf]
    %v53 = vstv %s51
    %v54 = vmul.f32 %v53, %v52
    %s55 = sld [smem:[#allocation6 + $0x3]]
    %v56 = vld [vmem:[#allocation2 + $0xc] sm:$0xf]
    %v57 = vstv %s55
    %v58 = vmul.f32 %v57, %v56
    %v59 = vadd.f32 %v46, %v50
    %v60 = vadd.f32 %v54, %v58
    %v61 = vadd.f32 %v59, %v60
    %v62 = vmax.f32 %v61, 0.0
    %v65 = vunpack.c.l.s4 1983009808
    %v66 = vunpack.c.0.s8 %v65
    %v67 = vlaneseq
    %v68 = vshrl.u32 %v67, 7
    %v69 = vsub.s32 %v66, %v68
    %v70 = vrot.slane %v62, %v69
    %v71 = vcombine.high %v70, %v70
    %vm74 = vcmask 1041408
    %v75 = vsel %vm74, %v70, 0.0
    %v76 = vsel %vm74, %v71, 0.0
    %v77 = vadd.f32 %v75, %v76
    %78 = vadd.xlane.f32.xlu0 %v77
    %v79 = vpop.xlane.xlu0 %78
    %v80 = vmul.f32 %v79, 0.00390625
    %s81 = sld [smem:[#allocation6 + $0x80]]
    %v82 = vstv %s81
    %v83 = vmul.f32 %v82, %v44
    %s84 = sld [smem:[#allocation6 + $0x81]]
    %v85 = vstv %s84
    %v86 = vmul.f32 %v85, %v48
    %s87 = sld [smem:[#allocation6 + $0x82]]
    %v88 = vstv %s87
    %v89 = vmul.f32 %v88, %v52
    %s90 = sld [smem:[#allocation6 + $0x83]]
    %v91 = vstv %s90
    %v92 = vmul.f32 %v91, %v56
    %v93 = vadd.f32 %v83, %v86
    %v94 = vadd.f32 %v89, %v92
    %v95 = vadd.f32 %v93, %v94
    %v96 = vmax.f32 %v95, 0.0
    %v99 = vunpack.c.l.s4 1983009808
    %v100 = vunpack.c.0.s8 %v99
    %v101 = vlaneseq
    %v102 = vshrl.u32 %v101, 7
    %v103 = vsub.s32 %v100, %v102
    %v104 = vrot.slane %v96, %v103
    %v105 = vcombine.high %v104, %v104
    %v108 = vsel %vm74, %v104, 0.0
    %v109 = vsel %vm74, %v105, 0.0
    %v110 = vadd.f32 %v108, %v109
    %111 = vadd.xlane.f32.xlu0 %v110
    %v112 = vpop.xlane.xlu0 %111
    %v113 = vmul.f32 %v112, 0.00390625
    %s114 = sld [smem:[#allocation6 + $0x100]]
    %v115 = vstv %s114
    %v116 = vmul.f32 %v115, %v44
    %s117 = sld [smem:[#allocation6 + $0x101]]
    %v118 = vstv %s117
    %v119 = vmul.f32 %v118, %v48
    %s120 = sld [smem:[#allocation6 + $0x102]]
    %v121 = vstv %s120
    %v122 = vmul.f32 %v121, %v52
    %s123 = sld [smem:[#allocation6 + $0x103]]
    %v124 = vstv %s123
    %v125 = vmul.f32 %v124, %v56
    %v126 = vadd.f32 %v116, %v119
    %v127 = vadd.f32 %v122, %v125
    %v128 = vadd.f32 %v126, %v127
    %v129 = vmax.f32 %v128, 0.0
    %v132 = vunpack.c.l.s4 1983009808
    %v133 = vunpack.c.0.s8 %v132
    %v134 = vlaneseq
    %v135 = vshrl.u32 %v134, 7
    %v136 = vsub.s32 %v133, %v135
    %v137 = vrot.slane %v129, %v136
    %v138 = vcombine.high %v137, %v137
    %v141 = vsel %vm74, %v137, 0.0
    %v142 = vsel %vm74, %v138, 0.0
    %v143 = vadd.f32 %v141, %v142
    %144 = vadd.xlane.f32.xlu0 %v143
    %v145 = vpop.xlane.xlu0 %144
    %v146 = vmul.f32 %v145, 0.00390625
    %s147 = sld [smem:[#allocation6 + $0x180]]
    %v148 = vstv %s147
    %v149 = vmul.f32 %v148, %v44
    %s150 = sld [smem:[#allocation6 + $0x181]]
    %v151 = vstv %s150
    %v152 = vmul.f32 %v151, %v48
    %s153 = sld [smem:[#allocation6 + $0x182]]
    %v154 = vstv %s153
    %v155 = vmul.f32 %v154, %v52
    %s156 = sld [smem:[#allocation6 + $0x183]]
    %v157 = vstv %s156
    %v158 = vmul.f32 %v157, %v56
    %v159 = vadd.f32 %v149, %v152
    %v160 = vadd.f32 %v155, %v158
    %v161 = vadd.f32 %v159, %v160
    %v162 = vmax.f32 %v161, 0.0
    %v165 = vunpack.c.l.s4 1983009808
    %v166 = vunpack.c.0.s8 %v165
    %v167 = vlaneseq
    %v168 = vshrl.u32 %v167, 7
    %v169 = vsub.s32 %v166, %v168
    %v170 = vrot.slane %v162, %v169
    %v171 = vcombine.high %v170, %v170
    %v174 = vsel %vm74, %v170, 0.0
    %v175 = vsel %vm74, %v171, 0.0
    %v176 = vadd.f32 %v174, %v175
    %177 = vadd.xlane.f32.xlu0 %v176
    %v178 = vpop.xlane.xlu0 %177
    %v179 = vmul.f32 %v178, 0.00390625
    %s180 = sld [smem:[#allocation6 + $0x200]]
    %v181 = vstv %s180
    %v182 = vmul.f32 %v181, %v44
    %s183 = sld [smem:[#allocation6 + $0x201]]
    %v184 = vstv %s183
    %v185 = vmul.f32 %v184, %v48
    %s186 = sld [smem:[#allocation6 + $0x202]]
    %v187 = vstv %s186
    %v188 = vmul.f32 %v187, %v52
    %s189 = sld [smem:[#allocation6 + $0x203]]
    %v190 = vstv %s189
    %v191 = vmul.f32 %v190, %v56
    %v192 = vadd.f32 %v182, %v185
    %v193 = vadd.f32 %v188, %v191
    %v194 = vadd.f32 %v192, %v193
    %v195 = vmax.f32 %v194, 0.0
    %v198 = vunpack.c.l.s4 1983009808
    %v199 = vunpack.c.0.s8 %v198
    %v200 = vlaneseq
    %v201 = vshrl.u32 %v200, 7
    %v202 = vsub.s32 %v199, %v201
    %v203 = vrot.slane %v195, %v202
    %v204 = vcombine.high %v203, %v203
    %v207 = vsel %vm74, %v203, 0.0
    %v208 = vsel %vm74, %v204, 0.0
    %v209 = vadd.f32 %v207, %v208
    %210 = vadd.xlane.f32.xlu0 %v209
    %v211 = vpop.xlane.xlu0 %210
    %v212 = vmul.f32 %v211, 0.00390625
    %s213 = sld [smem:[#allocation6 + $0x280]]
    %v214 = vstv %s213
    %v215 = vmul.f32 %v214, %v44
    %s216 = sld [smem:[#allocation6 + $0x281]]
    %v217 = vstv %s216
    %v218 = vmul.f32 %v217, %v48
    %s219 = sld [smem:[#allocation6 + $0x282]]
    %v220 = vstv %s219
    %v221 = vmul.f32 %v220, %v52
    %s222 = sld [smem:[#allocation6 + $0x283]]
    %v223 = vstv %s222
    %v224 = vmul.f32 %v223, %v56
    %v225 = vadd.f32 %v215, %v218
    %v226 = vadd.f32 %v221, %v224
    %v227 = vadd.f32 %v225, %v226
    %v228 = vmax.f32 %v227, 0.0
    %v231 = vunpack.c.l.s4 1983009808
    %v232 = vunpack.c.0.s8 %v231
    %v233 = vlaneseq
    %v234 = vshrl.u32 %v233, 7
    %v235 = vsub.s32 %v232, %v234
    %v236 = vrot.slane %v228, %v235
    %v237 = vcombine.high %v236, %v236
    %v240 = vsel %vm74, %v236, 0.0
    %v241 = vsel %vm74, %v237, 0.0
    %v242 = vadd.f32 %v240, %v241
    %243 = vadd.xlane.f32.xlu0 %v242
    %v244 = vpop.xlane.xlu0 %243
    %v245 = vmul.f32 %v244, 0.00390625
    %s246 = sld [smem:[#allocation6 + $0x300]]
    %v247 = vstv %s246
    %v248 = vmul.f32 %v247, %v44
    %s249 = sld [smem:[#allocation6 + $0x301]]
    %v250 = vstv %s249
    %v251 = vmul.f32 %v250, %v48
    %s252 = sld [smem:[#allocation6 + $0x302]]
    %v253 = vstv %s252
    %v254 = vmul.f32 %v253, %v52
    %s255 = sld [smem:[#allocation6 + $0x303]]
    %v256 = vstv %s255
    %v257 = vmul.f32 %v256, %v56
    %v258 = vadd.f32 %v248, %v251
    %v259 = vadd.f32 %v254, %v257
    %v260 = vadd.f32 %v258, %v259
    %v261 = vmax.f32 %v260, 0.0
    %v264 = vunpack.c.l.s4 1983009808
    %v265 = vunpack.c.0.s8 %v264
    %v266 = vlaneseq
    %v267 = vshrl.u32 %v266, 7
    %v268 = vsub.s32 %v265, %v267
    %v269 = vrot.slane %v261, %v268
    %v270 = vcombine.high %v269, %v269
    %v273 = vsel %vm74, %v269, 0.0
    %v274 = vsel %vm74, %v270, 0.0
    %v275 = vadd.f32 %v273, %v274
    %276 = vadd.xlane.f32.xlu0 %v275
    %v277 = vpop.xlane.xlu0 %276
    %v278 = vmul.f32 %v277, 0.00390625
    %s279 = sld [smem:[#allocation6 + $0x380]]
    %v280 = vstv %s279
    %v281 = vmul.f32 %v280, %v44
    %s282 = sld [smem:[#allocation6 + $0x381]]
    %v283 = vstv %s282
    %v284 = vmul.f32 %v283, %v48
    %s285 = sld [smem:[#allocation6 + $0x382]]
    %v286 = vstv %s285
    %v287 = vmul.f32 %v286, %v52
    %s288 = sld [smem:[#allocation6 + $0x383]]
    %v289 = vstv %s288
    %v290 = vmul.f32 %v289, %v56
    %v291 = vadd.f32 %v281, %v284
    %v292 = vadd.f32 %v287, %v290
    %v293 = vadd.f32 %v291, %v292
    %v294 = vmax.f32 %v293, 0.0
    %v297 = vunpack.c.l.s4 1983009808
    %v298 = vunpack.c.0.s8 %v297
    %v299 = vlaneseq
    %v300 = vshrl.u32 %v299, 7
    %v301 = vsub.s32 %v298, %v300
    %v302 = vrot.slane %v294, %v301
    %v303 = vcombine.high %v302, %v302
    %v306 = vsel %vm74, %v302, 0.0
    %v307 = vsel %vm74, %v303, 0.0
    %v308 = vadd.f32 %v306, %v307
    %309 = vadd.xlane.f32.xlu0 %v308
    %v310 = vpop.xlane.xlu0 %309
    %v311 = vmul.f32 %v310, 0.00390625
    %v312 = vld [vmem:[%s2] sm:$0xff]
    %v313 = vlaneseq
    %v314 = vshrl.u32 %v313, 7
    %v315 = vsub.s32 0, %v314
    %v316 = vrot.slane %v312, %v315
    %v317 = vmul.f32 %v80, %v316
    %v318 = vlaneseq
    %v319 = vshrl.u32 %v318, 7
    %v320 = vsub.s32 1, %v319
    %v321 = vrot.slane %v312, %v320
    %v322 = vmul.f32 %v113, %v321
    %v323 = vlaneseq
    %v324 = vshrl.u32 %v323, 7
    %v325 = vsub.s32 2, %v324
    %v326 = vrot.slane %v312, %v325
    %v327 = vmul.f32 %v146, %v326
    %v328 = vlaneseq
    %v329 = vshrl.u32 %v328, 7
    %v330 = vsub.s32 3, %v329
    %v331 = vrot.slane %v312, %v330
    %v332 = vmul.f32 %v179, %v331
    %v333 = vlaneseq
    %v334 = vshrl.u32 %v333, 7
    %v335 = vsub.s32 4, %v334
    %v336 = vrot.slane %v312, %v335
    %v337 = vmul.f32 %v212, %v336
    %v338 = vlaneseq
    %v339 = vshrl.u32 %v338, 7
    %v340 = vsub.s32 5, %v339
    %v341 = vrot.slane %v312, %v340
    %v342 = vmul.f32 %v245, %v341
    %v343 = vlaneseq
    %v344 = vshrl.u32 %v343, 7
    %v345 = vsub.s32 6, %v344
    %v346 = vrot.slane %v312, %v345
    %v347 = vmul.f32 %v278, %v346
    %v348 = vlaneseq
    %v349 = vshrl.u32 %v348, 7
    %v350 = vsub.s32 7, %v349
    %v351 = vrot.slane %v312, %v350
    %v352 = vmul.f32 %v311, %v351
    %v353 = vadd.f32 %v317, %v322
    %v354 = vadd.f32 %v327, %v332
    %v355 = vadd.f32 %v337, %v342
    %v356 = vadd.f32 %v347, %v352
    %v357 = vadd.f32 %v353, %v354
    %v358 = vadd.f32 %v355, %v356
    %v359 = vadd.f32 %v357, %v358
    %v360 = vld [vmem:[%s3] sm:$0x1]
    %v362 = vlaneseq
    %v363 = vshrl.u32 %v362, 7
    %v364 = vsub.s32 0, %v363
    %v365 = vrot.slane %v360, %v364
    %v367 = vadd.f32 %v359, %v365
    %vm368 = vcmask 58368
    %369 = vst.msk [vmem:[#allocation7] sm:$0x3] %vm368, %v367
    // Predicated region
    $region26: #{tpu_custom_call.1} parent=1 // pred_check
      _
    $region27: #{tpu_custom_call.1} parent=1 // pred_check_branch
      %371 = sbr.rel (0) target = $region29
    $region28: #{tpu_custom_call.1} parent=1 // pred_region
      %s373 = ssub.s32 32, 32
      %374 = vsyncadd [#allocation4], %s373
      %s376 = sshll.u32 [#allocation7], 4
      %s377 = int_to_ptr.vmem [resolvable:$true] %s376
      %379 = dma.vmem_to_hbm [thread:$0]  %s377, 32, %s4, [#allocation4]
    $region29: #{tpu_custom_call.1} parent=1 // pred_fallthru
      _
    // Predicated region
    $region30: #{tpu_custom_call.1} parent=1 // pred_check
      _
    $region31: #{tpu_custom_call.1} parent=1 // pred_check_branch
      %381 = sbr.rel (0) target = $region33
    $region32: #{tpu_custom_call.1} parent=1 // pred_region
      %382 = dma.done [#allocation4], 32
    $region33: #{tpu_custom_call.1} parent=1 // pred_fallthru
      _
    %383 = vsyncpa [#allocation3], 1
    %384 = vsyncpa [#allocation4], 1
    %385 = vsyncpa [#allocation5], 1

</llo_original>
